<compile_context>
chip_gen: v7x
topology: tpu7x:2x2x1
jax: 0.10.0
libtpu: 0.0.40
codegen_flags: <defaults>
</compile_context>

<pallas_src>
import functools

import jax
import jax.numpy as jnp
from jax.experimental import pallas as pl
from jax.experimental.pallas import tpu as pltpu


def _round_up(x, m):
    return (x + m - 1) // m * m


# ---------------------------------------------------------------------------
# Kernel
# ---------------------------------------------------------------------------
def _gru_stack_kernel(tok_ref, h_ref, emb_ref, w0_ref, wl_ref,
                      brz_ref, bin_ref, bhn_ref, out_ref,
                      *, hidden_pad, vocab_pad, num_layers):
    """Embedding gather + `num_layers` applications of the same GRU cell.

    tok_ref            : (TB, 1)      int32  token ids (padded rows use id 0)
    h_ref, out_ref     : (TB, Hp)     f32
    emb_ref            : (Vp, Hp)     bf16   padded embedding table
    w0_ref             : (2Hp, 4Hp)   bf16   layer-0 K-stacked [x|h] weight
                         cols: [gi_r+gh_r | gi_z+gh_z | gi_n | gh_n]
    wl_ref             : (Hp, 4Hp)    bf16   layer-loop weight (x == h),
                         r/z blocks pre-summed: [W_rz_sum | W_in^T | W_hn^T]
    brz_ref            : (1, 2Hp) f32 == [bir+bhr | biz+bhz]
    bin_ref, bhn_ref   : (1, Hp)  f32
    All gate boundaries are multiples of Hp (multiple of 128) -> lane-aligned.
    """
    Hp = hidden_pad
    Vp = vocab_pad
    TB = h_ref.shape[0]

    h = h_ref[...]                                          # (TB, Hp) f32

    # In-kernel embedding gather: one-hot(tokens) @ emb on the MXU.  Exact
    # selection of bf16 rows (coefficients are exactly 1.0), same precision
    # as gathering f32 then casting to bf16.
    tok = tok_ref[...]                                      # (TB, 1) int32
    vocab_iota = jax.lax.broadcasted_iota(jnp.int32, (TB, Vp), 1)
    onehot = jnp.where(vocab_iota == tok, 1.0, 0.0).astype(jnp.bfloat16)
    x_bf = jnp.dot(onehot, emb_ref[...],
                   preferred_element_type=jnp.float32).astype(jnp.bfloat16)

    # Hoist bias broadcasts out of the layer loop (JAX does not CSE them).
    b_rz = jnp.broadcast_to(brz_ref[...], (TB, 2 * Hp))
    b_in = jnp.broadcast_to(bin_ref[...], (TB, Hp))
    b_hn = jnp.broadcast_to(bhn_ref[...], (TB, Hp))

    def cell(g, h_prev):
        # g: (TB, 4Hp) f32 pre-activations = [gi_rz+gh_rz | gi_n | gh_n].
        rz = jax.nn.sigmoid(g[:, :2 * Hp] + b_rz)
        r, z = rz[:, :Hp], rz[:, Hp:]
        n = jnp.tanh(g[:, 2 * Hp:3 * Hp] + b_in + r * (g[:, 3 * Hp:] + b_hn))
        # Padded lanes: g = 0 -> z = 0.5, n = 0 -> h'_pad = 0.5 * h_pad,
        # which stays exactly 0 because h_pad starts at 0 (zero weight rows
        # beyond H also prevent padded lanes from bleeding into real lanes).
        return n + z * (h_prev - n)                         # == (1-z)*n + z*h

    # Layer 0 (x != h): K-stacked [x|h] @ (2Hp,4Hp); K = 2Hp fills the
    # 256-deep MXU on v6e/v7x, and the r/z gi+gh add happens inside the MXU.
    xh = jnp.concatenate([x_bf, h.astype(jnp.bfloat16)], axis=1)   # (TB, 2Hp)
    g0 = jnp.dot(xh, w0_ref[...], preferred_element_type=jnp.float32)
    h = cell(g0, h)

    # Layers >= 1: output == hidden, so the r/z input/hidden weights are
    # pre-summed -> one (TB,Hp)x(Hp,4Hp) matmul per layer (-33% MACs vs 6Hp).
    # num_layers is small and static -> Python unroll.
    for _ in range(num_layers - 1):
        g = jnp.dot(h.astype(jnp.bfloat16), wl_ref[...],
                    preferred_element_type=jnp.float32)
        h = cell(g, h)

    out_ref[...] = h.astype(out_ref.dtype)


# ---------------------------------------------------------------------------
# Parameter packing (done once, outside jit)
# ---------------------------------------------------------------------------
def _pad_gate_block(w_gate_t, H, Hp):
    """(H, H) x@W^T-layout gate block -> (Hp, Hp), zero padded."""
    return jnp.zeros((Hp, Hp), jnp.float32).at[:H, :H].set(w_gate_t)


def _pad_bias_gates(b, H, Hp, ngates):
    """b: (ngates*H,) -> (1, ngates*Hp) with each gate at a Hp boundary."""
    out = jnp.zeros((1, ngates * Hp), jnp.float32)
    for g in range(ngates):
        out = out.at[0, g * Hp:g * Hp + H].set(b[g * H:(g + 1) * H])
    return out


def pack_params(raw, hidden_size):
    H = hidden_size
    Hp = _round_up(max(H, 128), 128)
    wih, whh = raw["weight_ih"], raw["weight_hh"]
    # Per-gate transposed (x @ W^T) blocks, each padded to (Hp, Hp).  Gate
    # order r, z, n (PyTorch).
    ih = [_pad_gate_block(wih[g * H:(g + 1) * H, :].T, H, Hp) for g in range(3)]
    hh = [_pad_gate_block(whh[g * H:(g + 1) * H, :].T, H, Hp) for g in range(3)]
    zeros = jnp.zeros((Hp, Hp), jnp.float32)

    # Layer-0 K-stacked weight: [x | h] @ w0 -> [gi_r+gh_r | gi_z+gh_z | gi_n | gh_n]
    w0_top = jnp.concatenate([ih[0], ih[1], ih[2], zeros], axis=1)   # x rows
    w0_bot = jnp.concatenate([hh[0], hh[1], zeros, hh[2]], axis=1)   # h rows
    w0 = jnp.concatenate([w0_top, w0_bot], axis=0).astype(jnp.bfloat16)  # (2Hp,4Hp)

    # Layer-loop weight (x == h): r/z blocks pre-summed.
    w_loop = jnp.concatenate([ih[0] + hh[0], ih[1] + hh[1], ih[2], hh[2]],
                             axis=1).astype(jnp.bfloat16)            # (Hp, 4Hp)

    bih, bhh = raw["bias_ih"], raw["bias_hh"]
    b_rz = _pad_bias_gates(bih[:2 * H] + bhh[:2 * H], H, Hp, 2)      # (1, 2Hp)
    b_in = _pad_bias_gates(bih[2 * H:], H, Hp, 1)                    # (1, Hp)
    b_hn = _pad_bias_gates(bhh[2 * H:], H, Hp, 1)                    # (1, Hp)

    # Embedding table padded to (Vp, Hp) bf16 for the in-kernel one-hot gather.
    # TODO(synk): for large vocabularies (table does not fit VMEM) switch to a
    # scalar-prefetch + per-row DMA gather instead of the one-hot MXU gather.
    V = raw["embedding"].shape[0]
    Vp = _round_up(max(V, 128), 128)
    emb = (jnp.zeros((Vp, Hp), jnp.float32)
           .at[:V, :H].set(raw["embedding"]).astype(jnp.bfloat16))

    return {"emb": emb, "w0": w0, "w_loop": w_loop,
            "b_rz": b_rz, "b_in": b_in, "b_hn": b_hn}


# ---------------------------------------------------------------------------
# Forward wrapper
# ---------------------------------------------------------------------------
def _const_spec(shape):
    """Grid-invariant operand: constant index_map, single-buffered if the
    installed Pallas supports pipeline_mode."""
    idx_map = lambda i: (0,) * len(shape)
    try:
        return pl.BlockSpec(shape, idx_map, pipeline_mode=pl.Buffered(1))
    except (AttributeError, TypeError):
        return pl.BlockSpec(shape, idx_map)


def encoder_rnn_forward(tokens, hidden, packed, *, hidden_size, num_layers):
    """tokens: (B,) int; hidden: (1, B, H) f32.
    Returns (output, hidden), each (1, B, H), matching the PyTorch module."""
    assert num_layers >= 1
    H = hidden_size
    Hp = packed["w_loop"].shape[0]
    Vp = packed["emb"].shape[0]
    B = tokens.shape[0]

    # bf16 packs 16 rows per sublane tile -> round the batch to 16.
    Bp0 = _round_up(max(B, 16), 16)

    try:
        vmem_cap = int(pltpu.get_tpu_info().vmem_capacity_bytes)
    except Exception:
        vmem_cap = 64 << 20        # v7x physical per-TC; conservative fallback

    # Grid-invariant operands are single-buffered (Buffered(1)).
    const_bytes = (Vp * Hp * 2                 # embedding (bf16)
                   + 2 * Hp * 4 * Hp * 2       # w0 (bf16)
                   + Hp * 4 * Hp * 2           # w_loop (bf16)
                   + 4 * 8 * Hp * 4)           # biases (sublane-padded f32)

    def footprint(tb):
        io = 2 * 2 * tb * Hp * 4 + 2 * tb * 128 * 4   # h/out dbl-buffered + tokens
        live = tb * (4 * Hp + 4 * Hp + Vp + 2 * Hp) * 4  # g, bias bcasts, onehot, xh
        return const_bytes + io + live

    budget = int(0.6 * vmem_cap)
    cands = [c for c in (512, 256, 128, 64, 32, 16) if c <= Bp0] or [16]
    TB = 16
    for c in cands:
        if footprint(c) <= budget:
            TB = c
            break
    Bp = _round_up(Bp0, TB)
    # Give both v7x TensorCores a grid step when the batch allows it.
    if Bp // TB == 1 and TB >= 32:
        TB //= 2
    grid = Bp // TB

    vmem_limit = int(max(16 << 20,
                         min(int(1.25 * footprint(TB)) + (2 << 20),
                             int(0.9 * vmem_cap))))

    # Pad tokens / hidden.  Padded batch rows use token 0 and h = 0; they are
    # computed independently per row and sliced off at the end.
    # TODO(synk): in a real decode loop keep the hidden state padded (Bp,Hp)
    # between calls so these pad/slice passes disappear entirely.
    tok_p = jnp.zeros((Bp, 1), jnp.int32).at[:B, 0].set(tokens.astype(jnp.int32))
    h0 = hidden.reshape(B, H).astype(jnp.float32)
    hp = jnp.zeros((Bp, Hp), jnp.float32).at[:B, :H].set(h0)

    kernel = functools.partial(_gru_stack_kernel, hidden_pad=Hp,
                               vocab_pad=Vp, num_layers=num_layers)

    out = pl.pallas_call(
        kernel,
        out_shape=jax.ShapeDtypeStruct((Bp, Hp), jnp.float32),
        grid=(grid,),
        in_specs=[
            pl.BlockSpec((TB, 1), lambda i: (i, 0)),     # tokens
            pl.BlockSpec((TB, Hp), lambda i: (i, 0)),    # h0
            _const_spec((Vp, Hp)),                       # embedding (bf16)
            _const_spec((2 * Hp, 4 * Hp)),               # w0 (bf16)
            _const_spec((Hp, 4 * Hp)),                   # w_loop (bf16)
            _const_spec((1, 2 * Hp)),                    # b_rz
            _const_spec((1, Hp)),                        # b_in
            _const_spec((1, Hp)),                        # b_hn
        ],
        out_specs=pl.BlockSpec((TB, Hp), lambda i: (i, 0)),
        compiler_params=pltpu.CompilerParams(
            dimension_semantics=("parallel",),
            vmem_limit_bytes=vmem_limit),
    )(tok_p, hp, packed["emb"], packed["w0"], packed["w_loop"],
      packed["b_rz"], packed["b_in"], packed["b_hn"])

    y = out[:B, :H].reshape(1, B, H)
    # seq_len == 1, 1-layer GRU: output and hidden are identical by construction.
    return y, y


# ---------------------------------------------------------------------------
# Params + pure-JAX reference
# ---------------------------------------------------------------------------
def init_params(key, input_size, hidden_size):
    """Synthetic init with shapes matching nn.Embedding + nn.GRU (1 layer)."""
    k_emb, k_wih, k_whh, k_bih, k_bhh = jax.random.split(key, 5)
    H = hidden_size
    bound = 1.0 / jnp.sqrt(jnp.float32(H))
    return {
        "embedding": jax.random.normal(k_emb, (input_size, H), jnp.float32),
        "weight_ih": jax.random.uniform(k_wih, (3 * H, H), jnp.float32, -bound, bound),
        "weight_hh": jax.random.uniform(k_whh, (3 * H, H), jnp.float32, -bound, bound),
        "bias_ih": jax.random.uniform(k_bih, (3 * H,), jnp.float32, -bound, bound),
        "bias_hh": jax.random.uniform(k_bhh, (3 * H,), jnp.float32, -bound, bound),
    }


def _reference_forward(tokens, hidden, raw, num_layers):
    """f32 reference matching PyTorch GRU cell semantics."""
    H = raw["weight_ih"].shape[1]
    x = jnp.take(raw["embedding"], tokens, axis=0)
    h = hidden.reshape(-1, H)
    wih, whh = raw["weight_ih"], raw["weight_hh"]
    bih, bhh = raw["bias_ih"], raw["bias_hh"]
    for _ in range(num_layers):
        gi = x @ wih.T + bih
        gh = h @ whh.T + bhh
        r = jax.nn.sigmoid(gi[:, :H] + gh[:, :H])
        z = jax.nn.sigmoid(gi[:, H:2 * H] + gh[:, H:2 * H])
        n = jnp.tanh(gi[:, 2 * H:] + r * gh[:, 2 * H:])
        h = (1.0 - z) * n + z * h
        x = h
    return h


if __name__ == "__main__":
    def run_case(vocab, H, L, B, key, zero_hidden):
        k_params, k_tok, k_hid = jax.random.split(key, 3)
        raw = init_params(k_params, vocab, H)
        packed = pack_params(raw, H)
        tokens = jax.random.randint(k_tok, (B,), 0, vocab, jnp.int32)
        if zero_hidden:
            hidden0 = jnp.zeros((1, B, H), jnp.float32)          # initHidden()
        else:
            hidden0 = 0.1 * jax.random.normal(k_hid, (1, B, H), jnp.float32)
        fwd = jax.jit(functools.partial(encoder_rnn_forward,
                                        hidden_size=H, num_layers=L))
        output, hidden = fwd(tokens, hidden0, packed)
        jax.block_until_ready((output, hidden))
        assert output.shape == (1, B, H)
        assert hidden.shape == (1, B, H)
        ref = _reference_forward(tokens, hidden0, raw, L)
        assert bool(jnp.all(jnp.isfinite(output))), "non-finite output"
        err = float(jnp.max(jnp.abs(output[0] - ref)))
        assert err < 0.1, f"max abs error {err} vs f32 reference (bf16 tolerance)"
        return err

    key = jax.random.PRNGKey(0)
    k1, k2 = jax.random.split(key)
    # Small spec-consistent config (vocab=16, hidden=32, layers=2, batch=2).
    run_case(vocab=16, H=32, L=2, B=2, key=k1, zero_hidden=True)
    # Exercises padding (H not multiple of 128, B not multiple of 16), a
    # multi-step grid (megacore 'parallel' path), and a nonzero hidden state.
    run_case(vocab=30, H=48, L=3, B=20, key=k2, zero_hidden=False)

    print("KERNEL_OK")
</pallas_src>

<mosaic_0001>
module attributes {stable_mosaic.version = 11 : i64} {
  func.func @_gru_stack_kernel(%arg0: i32, %arg1: memref<16x1xi32, #tpu.memory_space<vmem>>, %arg2: memref<16x128xf32, #tpu.memory_space<vmem>>, %arg3: memref<128x128xbf16, #tpu.memory_space<vmem>>, %arg4: memref<256x512xbf16, #tpu.memory_space<vmem>>, %arg5: memref<128x512xbf16, #tpu.memory_space<vmem>>, %arg6: memref<1x256xf32, #tpu.memory_space<vmem>>, %arg7: memref<1x128xf32, #tpu.memory_space<vmem>>, %arg8: memref<1x128xf32, #tpu.memory_space<vmem>>, %arg9: memref<16x128xf32, #tpu.memory_space<vmem>>) attributes {dimension_semantics = [#tpu.dimension_semantics<parallel>], iteration_bounds = array<i64: 1>, scalar_prefetch = 0 : i64, scratch_operands = 0 : i64, tpu.core_type = #tpu.core_type<tc>, window_params = [{transform_indices = @transform_0, window_bounds = array<i64: 16, 1>}, {transform_indices = @transform_1, window_bounds = array<i64: 16, 128>}, {pipeline_mode = #tpu.pipeline_mode<synchronous>, transform_indices = @transform_2, window_bounds = array<i64: 128, 128>}, {pipeline_mode = #tpu.pipeline_mode<synchronous>, transform_indices = @transform_3, window_bounds = array<i64: 256, 512>}, {pipeline_mode = #tpu.pipeline_mode<synchronous>, transform_indices = @transform_4, window_bounds = array<i64: 128, 512>}, {pipeline_mode = #tpu.pipeline_mode<synchronous>, transform_indices = @transform_5, window_bounds = array<i64: 1, 256>}, {pipeline_mode = #tpu.pipeline_mode<synchronous>, transform_indices = @transform_6, window_bounds = array<i64: 1, 128>}, {pipeline_mode = #tpu.pipeline_mode<synchronous>, transform_indices = @transform_7, window_bounds = array<i64: 1, 128>}, {transform_indices = @transform_8, window_bounds = array<i64: 16, 128>}]} {
    %c0 = arith.constant 0 : index
    %c0_0 = arith.constant 0 : index
    %0 = vector.load %arg2[%c0, %c0_0] : memref<16x128xf32, #tpu.memory_space<vmem>>, vector<16x128xf32>
    %c0_1 = arith.constant 0 : index
    %c0_2 = arith.constant 0 : index
    %1 = vector.load %arg1[%c0_1, %c0_2] : memref<16x1xi32, #tpu.memory_space<vmem>>, vector<16x1xi32>
    %2 = tpu.iota {dimensions = array<i32: 1>} : vector<16x128xi32>
    %3 = vector.broadcast %1 : vector<16x1xi32> to vector<16x128xi32>
    %4 = arith.cmpi eq, %2, %3 : vector<16x128xi32>
    %cst = arith.constant 1.000000e+00 : f32
    %cst_3 = arith.constant 0.000000e+00 : f32
    %5 = vector.broadcast %cst : f32 to vector<16x128xf32>
    %6 = vector.broadcast %cst_3 : f32 to vector<16x128xf32>
    %7 = arith.select %4, %5, %6 : vector<16x128xi1>, vector<16x128xf32>
    %8 = arith.truncf %7 : vector<16x128xf32> to vector<16x128xbf16>
    %c0_4 = arith.constant 0 : index
    %c0_5 = arith.constant 0 : index
    %9 = vector.load %arg3[%c0_4, %c0_5] : memref<128x128xbf16, #tpu.memory_space<vmem>>, vector<128x128xbf16>
    %cst_6 = arith.constant dense<0.000000e+00> : vector<16x128xf32>
    %10 = tpu.matmul %8, %9, %cst_6 {dimension_numbers = #tpu.dot_dimension_numbers<[1], [0], [0], [1], [0, 0, 1, 1], [], []>} : vector<16x128xbf16>, vector<128x128xbf16>, vector<16x128xf32> -> vector<16x128xf32>
    %11 = arith.truncf %10 : vector<16x128xf32> to vector<16x128xbf16>
    %c0_7 = arith.constant 0 : index
    %c0_8 = arith.constant 0 : index
    %12 = vector.load %arg6[%c0_7, %c0_8] : memref<1x256xf32, #tpu.memory_space<vmem>>, vector<1x256xf32>
    %13 = vector.shape_cast %12 : vector<1x256xf32> to vector<1x256xf32>
    %14 = vector.broadcast %13 : vector<1x256xf32> to vector<16x256xf32>
    %c0_9 = arith.constant 0 : index
    %c0_10 = arith.constant 0 : index
    %15 = vector.load %arg7[%c0_9, %c0_10] : memref<1x128xf32, #tpu.memory_space<vmem>>, vector<1x128xf32>
    %16 = vector.shape_cast %15 : vector<1x128xf32> to vector<1x128xf32>
    %17 = vector.broadcast %16 : vector<1x128xf32> to vector<16x128xf32>
    %c0_11 = arith.constant 0 : index
    %c0_12 = arith.constant 0 : index
    %18 = vector.load %arg8[%c0_11, %c0_12] : memref<1x128xf32, #tpu.memory_space<vmem>>, vector<1x128xf32>
    %19 = vector.shape_cast %18 : vector<1x128xf32> to vector<1x128xf32>
    %20 = vector.broadcast %19 : vector<1x128xf32> to vector<16x128xf32>
    %21 = arith.truncf %0 : vector<16x128xf32> to vector<16x128xbf16>
    %22 = tpu.concatenate %11, %21 in 1 : vector<16x128xbf16>, vector<16x128xbf16> -> vector<16x256xbf16>
    %c0_13 = arith.constant 0 : index
    %c0_14 = arith.constant 0 : index
    %23 = vector.load %arg4[%c0_13, %c0_14] : memref<256x512xbf16, #tpu.memory_space<vmem>>, vector<256x512xbf16>
    %cst_15 = arith.constant dense<0.000000e+00> : vector<16x512xf32>
    %24 = tpu.matmul %22, %23, %cst_15 {dimension_numbers = #tpu.dot_dimension_numbers<[1], [0], [0], [1], [0, 0, 1, 1], [], []>} : vector<16x256xbf16>, vector<256x512xbf16>, vector<16x512xf32> -> vector<16x512xf32>
    %25 = vector.extract_strided_slice %24 {offsets = [0, 0], sizes = [16, 256], strides = [1, 1]} : vector<16x512xf32> to vector<16x256xf32>
    %26 = arith.addf %25, %14 : vector<16x256xf32>
    %27 = arith.negf %26 : vector<16x256xf32>
    %28 = math.exp %27 : vector<16x256xf32>
    %cst_16 = arith.constant 1.000000e+00 : f32
    %29 = vector.broadcast %cst_16 : f32 to vector<16x256xf32>
    %30 = arith.addf %29, %28 : vector<16x256xf32>
    %31 = arith.divf %29, %30 : vector<16x256xf32>
    %32 = vector.extract_strided_slice %31 {offsets = [0, 0], sizes = [16, 128], strides = [1, 1]} : vector<16x256xf32> to vector<16x128xf32>
    %33 = vector.extract_strided_slice %31 {offsets = [0, 128], sizes = [16, 128], strides = [1, 1]} : vector<16x256xf32> to vector<16x128xf32>
    %34 = vector.extract_strided_slice %24 {offsets = [0, 256], sizes = [16, 128], strides = [1, 1]} : vector<16x512xf32> to vector<16x128xf32>
    %35 = arith.addf %34, %17 : vector<16x128xf32>
    %36 = vector.extract_strided_slice %24 {offsets = [0, 384], sizes = [16, 128], strides = [1, 1]} : vector<16x512xf32> to vector<16x128xf32>
    %37 = arith.addf %36, %20 : vector<16x128xf32>
    %38 = arith.mulf %32, %37 : vector<16x128xf32>
    %39 = arith.addf %35, %38 : vector<16x128xf32>
    %40 = math.tanh %39 : vector<16x128xf32>
    %41 = arith.subf %0, %40 : vector<16x128xf32>
    %42 = arith.mulf %33, %41 : vector<16x128xf32>
    %43 = arith.addf %40, %42 : vector<16x128xf32>
    %44 = arith.truncf %43 : vector<16x128xf32> to vector<16x128xbf16>
    %c0_17 = arith.constant 0 : index
    %c0_18 = arith.constant 0 : index
    %45 = vector.load %arg5[%c0_17, %c0_18] : memref<128x512xbf16, #tpu.memory_space<vmem>>, vector<128x512xbf16>
    %cst_19 = arith.constant dense<0.000000e+00> : vector<16x512xf32>
    %46 = tpu.matmul %44, %45, %cst_19 {dimension_numbers = #tpu.dot_dimension_numbers<[1], [0], [0], [1], [0, 0, 1, 1], [], []>} : vector<16x128xbf16>, vector<128x512xbf16>, vector<16x512xf32> -> vector<16x512xf32>
    %47 = vector.extract_strided_slice %46 {offsets = [0, 0], sizes = [16, 256], strides = [1, 1]} : vector<16x512xf32> to vector<16x256xf32>
    %48 = arith.addf %47, %14 : vector<16x256xf32>
    %49 = arith.negf %48 : vector<16x256xf32>
    %50 = math.exp %49 : vector<16x256xf32>
    %cst_20 = arith.constant 1.000000e+00 : f32
    %51 = vector.broadcast %cst_20 : f32 to vector<16x256xf32>
    %52 = arith.addf %51, %50 : vector<16x256xf32>
    %53 = arith.divf %51, %52 : vector<16x256xf32>
    %54 = vector.extract_strided_slice %53 {offsets = [0, 0], sizes = [16, 128], strides = [1, 1]} : vector<16x256xf32> to vector<16x128xf32>
    %55 = vector.extract_strided_slice %53 {offsets = [0, 128], sizes = [16, 128], strides = [1, 1]} : vector<16x256xf32> to vector<16x128xf32>
    %56 = vector.extract_strided_slice %46 {offsets = [0, 256], sizes = [16, 128], strides = [1, 1]} : vector<16x512xf32> to vector<16x128xf32>
    %57 = arith.addf %56, %17 : vector<16x128xf32>
    %58 = vector.extract_strided_slice %46 {offsets = [0, 384], sizes = [16, 128], strides = [1, 1]} : vector<16x512xf32> to vector<16x128xf32>
    %59 = arith.addf %58, %20 : vector<16x128xf32>
    %60 = arith.mulf %54, %59 : vector<16x128xf32>
    %61 = arith.addf %57, %60 : vector<16x128xf32>
    %62 = math.tanh %61 : vector<16x128xf32>
    %63 = arith.subf %43, %62 : vector<16x128xf32>
    %64 = arith.mulf %55, %63 : vector<16x128xf32>
    %65 = arith.addf %62, %64 : vector<16x128xf32>
    %c0_21 = arith.constant 0 : index
    %c0_22 = arith.constant 0 : index
    %66 = vector.load %arg9[%c0_21, %c0_22] : memref<16x128xf32, #tpu.memory_space<vmem>>, vector<16x128xf32>
    tpu.vector_store %arg9[%c0_21, %c0_22], %65 {strides = array<i32>} : memref<16x128xf32, #tpu.memory_space<vmem>>, vector<16x128xf32>,
    return
  }
  func.func @transform_0(%arg0: i32) -> (i32, i32) {
    %c0_i32 = arith.constant 0 : i32
    %c0_i32_0 = arith.constant 0 : i32
    return %arg0, %c0_i32 : i32, i32
  }
  func.func @transform_1(%arg0: i32) -> (i32, i32) {
    %c0_i32 = arith.constant 0 : i32
    %c0_i32_0 = arith.constant 0 : i32
    return %arg0, %c0_i32 : i32, i32
  }
  func.func @transform_2(%arg0: i32) -> (i32, i32) {
    %c0_i32 = arith.constant 0 : i32
    %c0_i32_0 = arith.constant 0 : i32
    %c0_i32_1 = arith.constant 0 : i32
    return %c0_i32, %c0_i32_0 : i32, i32
  }
  func.func @transform_3(%arg0: i32) -> (i32, i32) {
    %c0_i32 = arith.constant 0 : i32
    %c0_i32_0 = arith.constant 0 : i32
    %c0_i32_1 = arith.constant 0 : i32
    return %c0_i32, %c0_i32_0 : i32, i32
  }
  func.func @transform_4(%arg0: i32) -> (i32, i32) {
    %c0_i32 = arith.constant 0 : i32
    %c0_i32_0 = arith.constant 0 : i32
    %c0_i32_1 = arith.constant 0 : i32
    return %c0_i32, %c0_i32_0 : i32, i32
  }
  func.func @transform_5(%arg0: i32) -> (i32, i32) {
    %c0_i32 = arith.constant 0 : i32
    %c0_i32_0 = arith.constant 0 : i32
    %c0_i32_1 = arith.constant 0 : i32
    return %c0_i32, %c0_i32_0 : i32, i32
  }
  func.func @transform_6(%arg0: i32) -> (i32, i32) {
    %c0_i32 = arith.constant 0 : i32
    %c0_i32_0 = arith.constant 0 : i32
    %c0_i32_1 = arith.constant 0 : i32
    return %c0_i32, %c0_i32_0 : i32, i32
  }
  func.func @transform_7(%arg0: i32) -> (i32, i32) {
    %c0_i32 = arith.constant 0 : i32
    %c0_i32_0 = arith.constant 0 : i32
    %c0_i32_1 = arith.constant 0 : i32
    return %c0_i32, %c0_i32_0 : i32, i32
  }
  func.func @transform_8(%arg0: i32) -> (i32, i32) {
    %c0_i32 = arith.constant 0 : i32
    %c0_i32_0 = arith.constant 0 : i32
    return %arg0, %c0_i32 : i32, i32
  }
}

</mosaic_0001>

<llo_original>
// kernel: encoder_rnn_forward.1
$region0: #{encoder_rnn_forward.1}
  #allocation0 [shape = 'u32[]', space=smem, size = 0x4, offset = 0x4, fixed_abs, tag = 'smem constant byte address 0x4 - core index']
  #allocation1 [shape = 'u32[144,128]{1,0:T(1,128)}', space=vmem, size = 0x12000, scoped, tag = 'internal scratch']
  %s0 = inlined_call_operand.vmem [shape: s32[16,1], index: 0, kind: input, shape index: {}]
  %s1 = inlined_call_operand.vmem [shape: f32[16,128], index: 1, kind: input, shape index: {}]
  %s2 = inlined_call_operand.vmem [shape: bf16[128,128], index: 2, kind: input, shape index: {}]
  %s3 = inlined_call_operand.hbm [shape: bf16[256,512], index: 3, kind: input, shape index: {}]
  %s4 = inlined_call_operand.hbm [shape: bf16[128,512], index: 4, kind: input, shape index: {}]
  %s5 = inlined_call_operand.vmem [shape: f32[1,256], index: 5, kind: input, shape index: {}]
  %s6 = inlined_call_operand.vmem [shape: f32[1,128], index: 6, kind: input, shape index: {}]
  %s7 = inlined_call_operand.vmem [shape: f32[1,128], index: 7, kind: input, shape index: {}]
  %s8 = inlined_call_operand.vmem [shape: f32[16,128], index: 8, kind: output, shape index: {}]
  %s9 = sld [smem:[#allocation0]]
  $region50: #{encoder_rnn_forward.1} parent=0
    _
  %s11 = ssub.s32 1, %s9
  %s12 = scalar_select 0, %s11, %s9
  $region1: #{encoder_rnn_forward.1} parent=0
    #allocation2 [shape = 'u8[262144]{0}', space=vmem, size = 0x40000, scoped, tag = 'input window, operand 3, single buffered']
    #allocation3 [shape = 's32[1]{0}', space=sflag, size = 0x4, scoped, tag = 'scoped memory for encoder_rnn_forward.1']
    #allocation4 [shape = 'u8[131072]{0}', space=vmem, size = 0x20000, scoped, tag = 'input window, operand 4, single buffered']
    #allocation5 [shape = 's32[1]{0}', space=sflag, size = 0x4, scoped, tag = 'scoped memory for encoder_rnn_forward.1']
    %13 = vsyncpa [#allocation3], 0
    %14 = vsyncpa [#allocation5], 0
    // Predicated region
    $region2: #{encoder_rnn_forward.1} parent=1 // pred_check
      _
    $region3: #{encoder_rnn_forward.1} parent=1 // pred_check_branch
      %16 = sbr.rel (0) target = $region5
    $region4: #{encoder_rnn_forward.1} parent=1 // pred_region
      _
    $region5: #{encoder_rnn_forward.1} parent=1 // pred_fallthru
      _
    // Predicated region
    $region6: #{encoder_rnn_forward.1} parent=1 // pred_check
      _
    $region7: #{encoder_rnn_forward.1} parent=1 // pred_check_branch
      %18 = sbr.rel (0) target = $region9
    $region8: #{encoder_rnn_forward.1} parent=1 // pred_region
      _
    $region9: #{encoder_rnn_forward.1} parent=1 // pred_fallthru
      _
    // Predicated region
    $region10: #{encoder_rnn_forward.1} parent=1 // pred_check
      _
    $region11: #{encoder_rnn_forward.1} parent=1 // pred_check_branch
      %20 = sbr.rel (0) target = $region13
    $region12: #{encoder_rnn_forward.1} parent=1 // pred_region
      _
    $region13: #{encoder_rnn_forward.1} parent=1 // pred_fallthru
      _
    // Predicated region
    $region14: #{encoder_rnn_forward.1} parent=1 // pred_check
      _
    $region15: #{encoder_rnn_forward.1} parent=1 // pred_check_branch
      %22 = sbr.rel (0) target = $region17
    $region16: #{encoder_rnn_forward.1} parent=1 // pred_region
      %s24 = ssub.s32 8192, 8192
      %25 = vsyncadd [#allocation3], %s24
      %s26 = sshll.u32 [#allocation2], 4
      %s27 = int_to_ptr.vmem [resolvable:$true] %s26
      %32 = dma.hbm_to_vmem [thread:$0]  %s3, 8192, %s27, [#allocation3], 256, 256, 16
    $region17: #{encoder_rnn_forward.1} parent=1 // pred_fallthru
      _
    // Predicated region
    $region18: #{encoder_rnn_forward.1} parent=1 // pred_check
      _
    $region19: #{encoder_rnn_forward.1} parent=1 // pred_check_branch
      %34 = sbr.rel (0) target = $region21
    $region20: #{encoder_rnn_forward.1} parent=1 // pred_region
      %s36 = ssub.s32 4096, 4096
      %37 = vsyncadd [#allocation5], %s36
      %s38 = sshll.u32 [#allocation4], 4
      %s39 = int_to_ptr.vmem [resolvable:$true] %s38
      %44 = dma.hbm_to_vmem [thread:$0]  %s4, 4096, %s39, [#allocation5], 256, 256, 16
    $region21: #{encoder_rnn_forward.1} parent=1 // pred_fallthru
      _
    // Predicated region
    $region22: #{encoder_rnn_forward.1} parent=1 // pred_check
      _
    $region23: #{encoder_rnn_forward.1} parent=1 // pred_check_branch
      %46 = sbr.rel (0) target = $region25
    $region24: #{encoder_rnn_forward.1} parent=1 // pred_region
      _
    $region25: #{encoder_rnn_forward.1} parent=1 // pred_fallthru
      _
    // Predicated region
    $region26: #{encoder_rnn_forward.1} parent=1 // pred_check
      _
    $region27: #{encoder_rnn_forward.1} parent=1 // pred_check_branch
      %48 = sbr.rel (0) target = $region29
    $region28: #{encoder_rnn_forward.1} parent=1 // pred_region
      _
    $region29: #{encoder_rnn_forward.1} parent=1 // pred_fallthru
      _
    // Predicated region
    $region30: #{encoder_rnn_forward.1} parent=1 // pred_check
      _
    $region31: #{encoder_rnn_forward.1} parent=1 // pred_check_branch
      %50 = sbr.rel (0) target = $region33
    $region32: #{encoder_rnn_forward.1} parent=1 // pred_region
      _
    $region33: #{encoder_rnn_forward.1} parent=1 // pred_fallthru
      _
    // Predicated region
    $region34: #{encoder_rnn_forward.1} parent=1 // pred_check
      _
    $region35: #{encoder_rnn_forward.1} parent=1 // pred_check_branch
      %52 = sbr.rel (0) target = $region37
    $region36: #{encoder_rnn_forward.1} parent=1 // pred_region
      %53 = dma.done [#allocation3], 8192
    $region37: #{encoder_rnn_forward.1} parent=1 // pred_fallthru
      _
    // Predicated region
    $region38: #{encoder_rnn_forward.1} parent=1 // pred_check
      _
    $region39: #{encoder_rnn_forward.1} parent=1 // pred_check_branch
      %55 = sbr.rel (0) target = $region41
    $region40: #{encoder_rnn_forward.1} parent=1 // pred_region
      %56 = dma.done [#allocation5], 4096
    $region41: #{encoder_rnn_forward.1} parent=1 // pred_fallthru
      _
    %v58 = vld [vmem:[%s1] sm:$0xff]
    %v59 = vld [vmem:[%s1 + $0x8] sm:$0xff]
    %v60 = vld [vmem:[%s0] sm:$0xff]
    %v61 = vld [vmem:[%s0 + $0x8] sm:$0xff]
    %v62 = vlaneseq
    %v63 = vand.u32 %v62, 127
    %64 = vset.pattern.permute.xlu0 0
    %65 = vperm.xlu0 %64, %v60
    %v66 = vpop.permute.xlu0 %65
    %67 = vset.pattern.permute.xlu0 0
    %68 = vperm.xlu0 %67, %v61
    %v69 = vpop.permute.xlu0 %68
    %vm70 = vcmp.eq.s32.totalorder %v63, %v66
    %vm71 = vcmp.eq.s32.totalorder %v63, %v69
    %v72 = vsel %vm70, 1.0, 0.0
    %v73 = vsel %vm71, 1.0, 0.0
    %v74 = vpack.c.bf16 %v73, %v72
    %v75 = vld [vmem:[%s2] sm:$0xf]
    %v76 = vld [vmem:[%s2 + $0x4] sm:$0xf]
    %v77 = vld [vmem:[%s2 + $0x8] sm:$0xf]
    %v78 = vld [vmem:[%s2 + $0xc] sm:$0xf]
    %v79 = vld [vmem:[%s2 + $0x10] sm:$0xf]
    %v80 = vld [vmem:[%s2 + $0x14] sm:$0xf]
    %v81 = vld [vmem:[%s2 + $0x18] sm:$0xf]
    %v82 = vld [vmem:[%s2 + $0x1c] sm:$0xf]
    %v83 = vld [vmem:[%s2 + $0x20] sm:$0xf]
    %v84 = vld [vmem:[%s2 + $0x24] sm:$0xf]
    %v85 = vld [vmem:[%s2 + $0x28] sm:$0xf]
    %v86 = vld [vmem:[%s2 + $0x2c] sm:$0xf]
    %v87 = vld [vmem:[%s2 + $0x30] sm:$0xf]
    %v88 = vld [vmem:[%s2 + $0x34] sm:$0xf]
    %v89 = vld [vmem:[%s2 + $0x38] sm:$0xf]
    %v90 = vld [vmem:[%s2 + $0x3c] sm:$0xf]
    %v107 = vunpack.c.l.b16 %v75
    %v108 = vunpack.c.l.b16 %v76
    %v109 = vunpack.c.l.b16 %v77
    %v110 = vunpack.c.l.b16 %v78
    %v111 = vunpack.c.l.b16 %v79
    %v112 = vunpack.c.l.b16 %v80
    %v113 = vunpack.c.l.b16 %v81
    %v114 = vunpack.c.l.b16 %v82
    %v115 = vunpack.c.l.b16 %v83
    %v116 = vunpack.c.l.b16 %v84
    %v117 = vunpack.c.l.b16 %v85
    %v118 = vunpack.c.l.b16 %v86
    %v119 = vunpack.c.l.b16 %v87
    %v120 = vunpack.c.l.b16 %v88
    %v121 = vunpack.c.l.b16 %v89
    %v122 = vunpack.c.l.b16 %v90
    %v123 = vpack.c.b16 %v108, %v107
    %v124 = vpack.c.b16 %v110, %v109
    %v125 = vpack.c.b16 %v112, %v111
    %v126 = vpack.c.b16 %v114, %v113
    %v127 = vpack.c.b16 %v116, %v115
    %v128 = vpack.c.b16 %v118, %v117
    %v129 = vpack.c.b16 %v120, %v119
    %v130 = vpack.c.b16 %v122, %v121
    %139 = vmatprep.subr.bf16.mxu0 0
    %140 = vmatpush1.bf16.msra.mxu0 %v123
    %141 = vmatprep.subr.bf16.mxu0 0
    %142 = vmatpush1.bf16.msra.mxu0 %v124
    %143 = vmatprep.subr.bf16.mxu0 0
    %144 = vmatpush1.bf16.msra.mxu0 %v125
    %145 = vmatprep.subr.bf16.mxu0 0
    %146 = vmatpush1.bf16.msra.mxu0 %v126
    %147 = vmatprep.subr.bf16.mxu0 0
    %148 = vmatpush1.bf16.msra.mxu0 %v127
    %149 = vmatprep.subr.bf16.mxu0 0
    %150 = vmatpush1.bf16.msra.mxu0 %v128
    %151 = vmatprep.subr.bf16.mxu0 0
    %152 = vmatpush1.bf16.msra.mxu0 %v129
    %153 = vmatprep.subr.bf16.mxu0 0
    %154 = vmatpush1.bf16.msra.mxu0 %v130
    %155 = vmatprep.subr.bf16.mxu0 0
    %156 = vmatpush1.bf16.msra.mxu0 0
    %157 = vmatprep.subr.bf16.mxu0 0
    %158 = vmatpush1.bf16.msra.mxu0 0
    %159 = vmatprep.subr.bf16.mxu0 0
    %160 = vmatpush1.bf16.msra.mxu0 0
    %161 = vmatprep.subr.bf16.mxu0 0
    %162 = vmatpush1.bf16.msra.mxu0 0
    %163 = vmatprep.subr.bf16.mxu0 0
    %164 = vmatpush1.bf16.msra.mxu0 0
    %165 = vmatprep.subr.bf16.mxu0 0
    %166 = vmatpush1.bf16.msra.mxu0 0
    %167 = vmatprep.subr.bf16.mxu0 0
    %168 = vmatpush1.bf16.msra.mxu0 0
    %169 = vmatprep.subr.bf16.mxu0 0
    %170 = vmatpush1.bf16.msra.mxu0 0
    %171 = vmatprep.mubr.bf16.mxu0 0
    %172 = vmatmul.mubr.bf16.gmra.mrb[0].mxu0 %v74
    %v173 = vpop.f32.mrb[0].mxu0
    %v174 = vadd.f32 0.0, %v173
    %v175 = vpop.f32.mrb[0].mxu0
    %v176 = vpop.f32.mrb[0].mxu0
    %v177 = vadd.f32 0.0, %v176
    %v178 = vpop.f32.mrb[0].mxu0
    %179 = vdwg.mxu0
    %v180 = vpack.c.bf16 %v177, %v174
    %v181 = vld [vmem:[%s5] sm:$0x3]
    %v183 = vlaneseq
    %v184 = vshrl.u32 %v183, 7
    %v185 = vsub.s32 0, %v184
    %v186 = vrot.slane %v181, %v185
    %v187 = vlaneseq
    %v188 = vshrl.u32 %v187, 7
    %v189 = vsub.s32 1, %v188
    %v190 = vrot.slane %v181, %v189
    %v193 = vld [vmem:[%s6] sm:$0x1]
    %v195 = vlaneseq
    %v196 = vshrl.u32 %v195, 7
    %v197 = vsub.s32 0, %v196
    %v198 = vrot.slane %v193, %v197
    %v200 = vld [vmem:[%s7] sm:$0x1]
    %v202 = vlaneseq
    %v203 = vshrl.u32 %v202, 7
    %v204 = vsub.s32 0, %v203
    %v205 = vrot.slane %v200, %v204
    %v207 = vpack.c.bf16 %v59, %v58
    %v208 = vld [vmem:[#allocation2] sm:$0xff]
    %v209 = vld [vmem:[#allocation2 + $0x8] sm:$0xff]
    %v210 = vld [vmem:[#allocation2 + $0x10] sm:$0xff]
    %v211 = vld [vmem:[#allocation2 + $0x18] sm:$0xff]
    %v212 = vld [vmem:[#allocation2 + $0x20] sm:$0xff]
    %v213 = vld [vmem:[#allocation2 + $0x28] sm:$0xff]
    %v214 = vld [vmem:[#allocation2 + $0x30] sm:$0xff]
    %v215 = vld [vmem:[#allocation2 + $0x38] sm:$0xff]
    %v216 = vld [vmem:[#allocation2 + $0x40] sm:$0xff]
    %v217 = vld [vmem:[#allocation2 + $0x48] sm:$0xff]
    %v218 = vld [vmem:[#allocation2 + $0x50] sm:$0xff]
    %v219 = vld [vmem:[#allocation2 + $0x58] sm:$0xff]
    %v220 = vld [vmem:[#allocation2 + $0x60] sm:$0xff]
    %v221 = vld [vmem:[#allocation2 + $0x68] sm:$0xff]
    %v222 = vld [vmem:[#allocation2 + $0x70] sm:$0xff]
    %v223 = vld [vmem:[#allocation2 + $0x78] sm:$0xff]
    %v224 = vld [vmem:[#allocation2 + $0x80] sm:$0xff]
    %v225 = vld [vmem:[#allocation2 + $0x88] sm:$0xff]
    %v226 = vld [vmem:[#allocation2 + $0x90] sm:$0xff]
    %v227 = vld [vmem:[#allocation2 + $0x98] sm:$0xff]
    %v228 = vld [vmem:[#allocation2 + $0xa0] sm:$0xff]
    %v229 = vld [vmem:[#allocation2 + $0xa8] sm:$0xff]
    %v230 = vld [vmem:[#allocation2 + $0xb0] sm:$0xff]
    %v231 = vld [vmem:[#allocation2 + $0xb8] sm:$0xff]
    %v232 = vld [vmem:[#allocation2 + $0xc0] sm:$0xff]
    %v233 = vld [vmem:[#allocation2 + $0xc8] sm:$0xff]
    %v234 = vld [vmem:[#allocation2 + $0xd0] sm:$0xff]
    %v235 = vld [vmem:[#allocation2 + $0xd8] sm:$0xff]
    %v236 = vld [vmem:[#allocation2 + $0xe0] sm:$0xff]
    %v237 = vld [vmem:[#allocation2 + $0xe8] sm:$0xff]
    %v238 = vld [vmem:[#allocation2 + $0xf0] sm:$0xff]
    %v239 = vld [vmem:[#allocation2 + $0xf8] sm:$0xff]
    %v240 = vld [vmem:[#allocation2 + $0x100] sm:$0xff]
    %v241 = vld [vmem:[#allocation2 + $0x108] sm:$0xff]
    %v242 = vld [vmem:[#allocation2 + $0x110] sm:$0xff]
    %v243 = vld [vmem:[#allocation2 + $0x118] sm:$0xff]
    %v244 = vld [vmem:[#allocation2 + $0x120] sm:$0xff]
    %v245 = vld [vmem:[#allocation2 + $0x128] sm:$0xff]
    %v246 = vld [vmem:[#allocation2 + $0x130] sm:$0xff]
    %v247 = vld [vmem:[#allocation2 + $0x138] sm:$0xff]
    %v248 = vld [vmem:[#allocation2 + $0x140] sm:$0xff]
    %v249 = vld [vmem:[#allocation2 + $0x148] sm:$0xff]
    %v250 = vld [vmem:[#allocation2 + $0x150] sm:$0xff]
    %v251 = vld [vmem:[#allocation2 + $0x158] sm:$0xff]
    %v252 = vld [vmem:[#allocation2 + $0x160] sm:$0xff]
    %v253 = vld [vmem:[#allocation2 + $0x168] sm:$0xff]
    %v254 = vld [vmem:[#allocation2 + $0x170] sm:$0xff]
    %v255 = vld [vmem:[#allocation2 + $0x178] sm:$0xff]
    %v256 = vld [vmem:[#allocation2 + $0x180] sm:$0xff]
    %v257 = vld [vmem:[#allocation2 + $0x188] sm:$0xff]
    %v258 = vld [vmem:[#allocation2 + $0x190] sm:$0xff]
    %v259 = vld [vmem:[#allocation2 + $0x198] sm:$0xff]
    %v260 = vld [vmem:[#allocation2 + $0x1a0] sm:$0xff]
    %v261 = vld [vmem:[#allocation2 + $0x1a8] sm:$0xff]
    %v262 = vld [vmem:[#allocation2 + $0x1b0] sm:$0xff]
    %v263 = vld [vmem:[#allocation2 + $0x1b8] sm:$0xff]
    %v264 = vld [vmem:[#allocation2 + $0x1c0] sm:$0xff]
    %v265 = vld [vmem:[#allocation2 + $0x1c8] sm:$0xff]
    %v266 = vld [vmem:[#allocation2 + $0x1d0] sm:$0xff]
    %v267 = vld [vmem:[#allocation2 + $0x1d8] sm:$0xff]
    %v268 = vld [vmem:[#allocation2 + $0x1e0] sm:$0xff]
    %v269 = vld [vmem:[#allocation2 + $0x1e8] sm:$0xff]
    %v270 = vld [vmem:[#allocation2 + $0x1f0] sm:$0xff]
    %v271 = vld [vmem:[#allocation2 + $0x1f8] sm:$0xff]
    %v336 = vunpack.c.l.b16 %v208
    %v337 = vunpack.c.h.b16 %v208
    %v338 = vunpack.c.l.b16 %v209
    %v339 = vunpack.c.h.b16 %v209
    %v340 = vunpack.c.l.b16 %v210
    %v341 = vunpack.c.h.b16 %v210
    %v342 = vunpack.c.l.b16 %v211
    %v343 = vunpack.c.h.b16 %v211
    %v344 = vunpack.c.l.b16 %v212
    %v345 = vunpack.c.h.b16 %v212
    %v346 = vunpack.c.l.b16 %v213
    %v347 = vunpack.c.h.b16 %v213
    %v348 = vunpack.c.l.b16 %v214
    %v349 = vunpack.c.h.b16 %v214
    %v350 = vunpack.c.l.b16 %v215
    %v351 = vunpack.c.h.b16 %v215
    %v352 = vunpack.c.l.b16 %v216
    %v353 = vunpack.c.h.b16 %v216
    %v354 = vunpack.c.l.b16 %v217
    %v355 = vunpack.c.h.b16 %v217
    %v356 = vunpack.c.l.b16 %v218
    %v357 = vunpack.c.h.b16 %v218
    %v358 = vunpack.c.l.b16 %v219
    %v359 = vunpack.c.h.b16 %v219
    %v360 = vunpack.c.l.b16 %v220
    %v361 = vunpack.c.h.b16 %v220
    %v362 = vunpack.c.l.b16 %v221
    %v363 = vunpack.c.h.b16 %v221
    %v364 = vunpack.c.l.b16 %v222
    %v365 = vunpack.c.h.b16 %v222
    %v366 = vunpack.c.l.b16 %v223
    %v367 = vunpack.c.h.b16 %v223
    %v368 = vunpack.c.l.b16 %v224
    %v369 = vunpack.c.h.b16 %v224
    %v370 = vunpack.c.l.b16 %v225
    %v371 = vunpack.c.h.b16 %v225
    %v372 = vunpack.c.l.b16 %v226
    %v373 = vunpack.c.h.b16 %v226
    %v374 = vunpack.c.l.b16 %v227
    %v375 = vunpack.c.h.b16 %v227
    %v376 = vunpack.c.l.b16 %v228
    %v377 = vunpack.c.h.b16 %v228
    %v378 = vunpack.c.l.b16 %v229
    %v379 = vunpack.c.h.b16 %v229
    %v380 = vunpack.c.l.b16 %v230
    %v381 = vunpack.c.h.b16 %v230
    %v382 = vunpack.c.l.b16 %v231
    %v383 = vunpack.c.h.b16 %v231
    %v384 = vunpack.c.l.b16 %v232
    %v385 = vunpack.c.h.b16 %v232
    %v386 = vunpack.c.l.b16 %v233
    %v387 = vunpack.c.h.b16 %v233
    %v388 = vunpack.c.l.b16 %v234
    %v389 = vunpack.c.h.b16 %v234
    %v390 = vunpack.c.l.b16 %v235
    %v391 = vunpack.c.h.b16 %v235
    %v392 = vunpack.c.l.b16 %v236
    %v393 = vunpack.c.h.b16 %v236
    %v394 = vunpack.c.l.b16 %v237
    %v395 = vunpack.c.h.b16 %v237
    %v396 = vunpack.c.l.b16 %v238
    %v397 = vunpack.c.h.b16 %v238
    %v398 = vunpack.c.l.b16 %v239
    %v399 = vunpack.c.h.b16 %v239
    %v400 = vunpack.c.l.b16 %v240
    %v401 = vunpack.c.h.b16 %v240
    %v402 = vunpack.c.l.b16 %v241
    %v403 = vunpack.c.h.b16 %v241
    %v404 = vunpack.c.l.b16 %v242
    %v405 = vunpack.c.h.b16 %v242
    %v406 = vunpack.c.l.b16 %v243
    %v407 = vunpack.c.h.b16 %v243
    %v408 = vunpack.c.l.b16 %v244
    %v409 = vunpack.c.h.b16 %v244
    %v410 = vunpack.c.l.b16 %v245
    %v411 = vunpack.c.h.b16 %v245
    %v412 = vunpack.c.l.b16 %v246
    %v413 = vunpack.c.h.b16 %v246
    %v414 = vunpack.c.l.b16 %v247
    %v415 = vunpack.c.h.b16 %v247
    %v416 = vunpack.c.l.b16 %v248
    %v417 = vunpack.c.h.b16 %v248
    %v418 = vunpack.c.l.b16 %v249
    %v419 = vunpack.c.h.b16 %v249
    %v420 = vunpack.c.l.b16 %v250
    %v421 = vunpack.c.h.b16 %v250
    %v422 = vunpack.c.l.b16 %v251
    %v423 = vunpack.c.h.b16 %v251
    %v424 = vunpack.c.l.b16 %v252
    %v425 = vunpack.c.h.b16 %v252
    %v426 = vunpack.c.l.b16 %v253
    %v427 = vunpack.c.h.b16 %v253
    %v428 = vunpack.c.l.b16 %v254
    %v429 = vunpack.c.h.b16 %v254
    %v430 = vunpack.c.l.b16 %v255
    %v431 = vunpack.c.h.b16 %v255
    %v432 = vunpack.c.l.b16 %v256
    %v433 = vunpack.c.h.b16 %v256
    %v434 = vunpack.c.l.b16 %v257
    %v435 = vunpack.c.h.b16 %v257
    %v436 = vunpack.c.l.b16 %v258
    %v437 = vunpack.c.h.b16 %v258
    %v438 = vunpack.c.l.b16 %v259
    %v439 = vunpack.c.h.b16 %v259
    %v440 = vunpack.c.l.b16 %v260
    %v441 = vunpack.c.h.b16 %v260
    %v442 = vunpack.c.l.b16 %v261
    %v443 = vunpack.c.h.b16 %v261
    %v444 = vunpack.c.l.b16 %v262
    %v445 = vunpack.c.h.b16 %v262
    %v446 = vunpack.c.l.b16 %v263
    %v447 = vunpack.c.h.b16 %v263
    %v448 = vunpack.c.l.b16 %v264
    %v449 = vunpack.c.h.b16 %v264
    %v450 = vunpack.c.l.b16 %v265
    %v451 = vunpack.c.h.b16 %v265
    %v452 = vunpack.c.l.b16 %v266
    %v453 = vunpack.c.h.b16 %v266
    %v454 = vunpack.c.l.b16 %v267
    %v455 = vunpack.c.h.b16 %v267
    %v456 = vunpack.c.l.b16 %v268
    %v457 = vunpack.c.h.b16 %v268
    %v458 = vunpack.c.l.b16 %v269
    %v459 = vunpack.c.h.b16 %v269
    %v460 = vunpack.c.l.b16 %v270
    %v461 = vunpack.c.h.b16 %v270
    %v462 = vunpack.c.l.b16 %v271
    %v463 = vunpack.c.h.b16 %v271
    %v464 = vpack.c.b16 %v340, %v336
    %v465 = vpack.c.b16 %v341, %v337
    %v466 = vpack.c.b16 %v342, %v338
    %v467 = vpack.c.b16 %v343, %v339
    %v468 = vpack.c.b16 %v348, %v344
    %v469 = vpack.c.b16 %v349, %v345
    %v470 = vpack.c.b16 %v350, %v346
    %v471 = vpack.c.b16 %v351, %v347
    %v472 = vpack.c.b16 %v356, %v352
    %v473 = vpack.c.b16 %v357, %v353
    %v474 = vpack.c.b16 %v358, %v354
    %v475 = vpack.c.b16 %v359, %v355
    %v476 = vpack.c.b16 %v364, %v360
    %v477 = vpack.c.b16 %v365, %v361
    %v478 = vpack.c.b16 %v366, %v362
    %v479 = vpack.c.b16 %v367, %v363
    %v480 = vpack.c.b16 %v372, %v368
    %v481 = vpack.c.b16 %v373, %v369
    %v482 = vpack.c.b16 %v374, %v370
    %v483 = vpack.c.b16 %v375, %v371
    %v484 = vpack.c.b16 %v380, %v376
    %v485 = vpack.c.b16 %v381, %v377
    %v486 = vpack.c.b16 %v382, %v378
    %v487 = vpack.c.b16 %v383, %v379
    %v488 = vpack.c.b16 %v388, %v384
    %v489 = vpack.c.b16 %v389, %v385
    %v490 = vpack.c.b16 %v390, %v386
    %v491 = vpack.c.b16 %v391, %v387
    %v492 = vpack.c.b16 %v396, %v392
    %v493 = vpack.c.b16 %v397, %v393
    %v494 = vpack.c.b16 %v398, %v394
    %v495 = vpack.c.b16 %v399, %v395
    %v496 = vpack.c.b16 %v404, %v400
    %v497 = vpack.c.b16 %v405, %v401
    %v498 = vpack.c.b16 %v406, %v402
    %v499 = vpack.c.b16 %v407, %v403
    %v500 = vpack.c.b16 %v412, %v408
    %v501 = vpack.c.b16 %v413, %v409
    %v502 = vpack.c.b16 %v414, %v410
    %v503 = vpack.c.b16 %v415, %v411
    %v504 = vpack.c.b16 %v420, %v416
    %v505 = vpack.c.b16 %v421, %v417
    %v506 = vpack.c.b16 %v422, %v418
    %v507 = vpack.c.b16 %v423, %v419
    %v508 = vpack.c.b16 %v428, %v424
    %v509 = vpack.c.b16 %v429, %v425
    %v510 = vpack.c.b16 %v430, %v426
    %v511 = vpack.c.b16 %v431, %v427
    %v512 = vpack.c.b16 %v436, %v432
    %v513 = vpack.c.b16 %v437, %v433
    %v514 = vpack.c.b16 %v438, %v434
    %v515 = vpack.c.b16 %v439, %v435
    %v516 = vpack.c.b16 %v444, %v440
    %v517 = vpack.c.b16 %v445, %v441
    %v518 = vpack.c.b16 %v446, %v442
    %v519 = vpack.c.b16 %v447, %v443
    %v520 = vpack.c.b16 %v452, %v448
    %v521 = vpack.c.b16 %v453, %v449
    %v522 = vpack.c.b16 %v454, %v450
    %v523 = vpack.c.b16 %v455, %v451
    %v524 = vpack.c.b16 %v460, %v456
    %v525 = vpack.c.b16 %v461, %v457
    %v526 = vpack.c.b16 %v462, %v458
    %v527 = vpack.c.b16 %v463, %v459
    %592 = vmatprep.subr.bf16.mxu0 %v465
    %593 = vmatpush1.bf16.msra.mxu0 %v464
    %594 = vmatprep.subr.bf16.mxu0 %v469
    %595 = vmatpush1.bf16.msra.mxu0 %v468
    %596 = vmatprep.subr.bf16.mxu0 %v473
    %597 = vmatpush1.bf16.msra.mxu0 %v472
    %598 = vmatprep.subr.bf16.mxu0 %v477
    %599 = vmatpush1.bf16.msra.mxu0 %v476
    %600 = vmatprep.subr.bf16.mxu0 %v481
    %601 = vmatpush1.bf16.msra.mxu0 %v480
    %602 = vmatprep.subr.bf16.mxu0 %v485
    %603 = vmatpush1.bf16.msra.mxu0 %v484
    %604 = vmatprep.subr.bf16.mxu0 %v489
    %605 = vmatpush1.bf16.msra.mxu0 %v488
    %606 = vmatprep.subr.bf16.mxu0 %v493
    %607 = vmatpush1.bf16.msra.mxu0 %v492
    %608 = vmatprep.subr.bf16.mxu0 %v497
    %609 = vmatpush1.bf16.msra.mxu0 %v496
    %610 = vmatprep.subr.bf16.mxu0 %v501
    %611 = vmatpush1.bf16.msra.mxu0 %v500
    %612 = vmatprep.subr.bf16.mxu0 %v505
    %613 = vmatpush1.bf16.msra.mxu0 %v504
    %614 = vmatprep.subr.bf16.mxu0 %v509
    %615 = vmatpush1.bf16.msra.mxu0 %v508
    %616 = vmatprep.subr.bf16.mxu0 %v513
    %617 = vmatpush1.bf16.msra.mxu0 %v512
    %618 = vmatprep.subr.bf16.mxu0 %v517
    %619 = vmatpush1.bf16.msra.mxu0 %v516
    %620 = vmatprep.subr.bf16.mxu0 %v521
    %621 = vmatpush1.bf16.msra.mxu0 %v520
    %622 = vmatprep.subr.bf16.mxu0 %v525
    %623 = vmatpush1.bf16.msra.mxu0 %v524
    %624 = vmatprep.mubr.bf16.mxu0 %v207
    %625 = vmatmul.mubr.bf16.gmra.mrb[0].mxu0 %v180
    %v626 = vpop.f32.mrb[0].mxu0
    %v627 = vadd.f32 0.0, %v626
    %v628 = vpop.f32.mrb[0].mxu0
    %v629 = vadd.f32 0.0, %v628
    %v630 = vpop.f32.mrb[0].mxu0
    %v631 = vadd.f32 0.0, %v630
    %v632 = vpop.f32.mrb[0].mxu0
    %v633 = vadd.f32 0.0, %v632
    %634 = vdwg.mxu0
    %635 = vmatprep.subr.bf16.mxu0 %v467
    %636 = vmatpush1.bf16.msra.mxu0 %v466
    %637 = vmatprep.subr.bf16.mxu0 %v471
    %638 = vmatpush1.bf16.msra.mxu0 %v470
    %639 = vmatprep.subr.bf16.mxu0 %v475
    %640 = vmatpush1.bf16.msra.mxu0 %v474
    %641 = vmatprep.subr.bf16.mxu0 %v479
    %642 = vmatpush1.bf16.msra.mxu0 %v478
    %643 = vmatprep.subr.bf16.mxu0 %v483
    %644 = vmatpush1.bf16.msra.mxu0 %v482
    %645 = vmatprep.subr.bf16.mxu0 %v487
    %646 = vmatpush1.bf16.msra.mxu0 %v486
    %647 = vmatprep.subr.bf16.mxu0 %v491
    %648 = vmatpush1.bf16.msra.mxu0 %v490
    %649 = vmatprep.subr.bf16.mxu0 %v495
    %650 = vmatpush1.bf16.msra.mxu0 %v494
    %651 = vmatprep.subr.bf16.mxu0 %v499
    %652 = vmatpush1.bf16.msra.mxu0 %v498
    %653 = vmatprep.subr.bf16.mxu0 %v503
    %654 = vmatpush1.bf16.msra.mxu0 %v502
    %655 = vmatprep.subr.bf16.mxu0 %v507
    %656 = vmatpush1.bf16.msra.mxu0 %v506
    %657 = vmatprep.subr.bf16.mxu0 %v511
    %658 = vmatpush1.bf16.msra.mxu0 %v510
    %659 = vmatprep.subr.bf16.mxu0 %v515
    %660 = vmatpush1.bf16.msra.mxu0 %v514
    %661 = vmatprep.subr.bf16.mxu0 %v519
    %662 = vmatpush1.bf16.msra.mxu0 %v518
    %663 = vmatprep.subr.bf16.mxu0 %v523
    %664 = vmatpush1.bf16.msra.mxu0 %v522
    %665 = vmatprep.subr.bf16.mxu0 %v527
    %666 = vmatpush1.bf16.msra.mxu0 %v526
    %667 = vmatprep.mubr.bf16.mxu0 %v207
    %668 = vmatmul.mubr.bf16.gmra.mrb[0].mxu0 %v180
    %v669 = vpop.f32.mrb[0].mxu0
    %v670 = vadd.f32 0.0, %v669
    %v671 = vpop.f32.mrb[0].mxu0
    %v672 = vadd.f32 0.0, %v671
    %v673 = vpop.f32.mrb[0].mxu0
    %v674 = vadd.f32 0.0, %v673
    %v675 = vpop.f32.mrb[0].mxu0
    %v676 = vadd.f32 0.0, %v675
    %677 = vdwg.mxu0
    %v678 = vadd.f32 %v627, %v186
    %v679 = vadd.f32 %v629, %v190
    %v680 = vadd.f32 %v631, %v186
    %v681 = vadd.f32 %v633, %v190
    %v682 = vxor.u32 %v678, 2147483648
    %v683 = vxor.u32 %v679, 2147483648
    %v684 = vxor.u32 %v680, 2147483648
    %v685 = vxor.u32 %v681, 2147483648
    %v686 = vmul.f32 %v682, 1.442695
    %v687 = vpow.pop %v686
    %v688 = vmul.f32 %v683, 1.442695
    %v689 = vpow.pop %v688
    %v690 = vmul.f32 %v684, 1.442695
    %v691 = vpow.pop %v690
    %v692 = vmul.f32 %v685, 1.442695
    %v693 = vpow.pop %v692
    %v694 = vadd.f32 %v687, 1.0
    %v695 = vadd.f32 %v689, 1.0
    %v696 = vadd.f32 %v691, 1.0
    %v697 = vadd.f32 %v693, 1.0
    %v698 = vrcp.pop %v694
    %v699 = vmul.f32 1.0, %v698
    %v700 = vrcp.pop %v695
    %v701 = vmul.f32 1.0, %v700
    %v702 = vrcp.pop %v696
    %v703 = vmul.f32 1.0, %v702
    %v704 = vrcp.pop %v697
    %v705 = vmul.f32 1.0, %v704
    %v706 = vadd.f32 %v670, %v198
    %v707 = vadd.f32 %v674, %v198
    %v708 = vadd.f32 %v672, %v205
    %v709 = vadd.f32 %v676, %v205
    %v710 = vmul.f32 %v699, %v708
    %v711 = vmul.f32 %v703, %v709
    %v712 = vadd.f32 %v706, %v710
    %v713 = vadd.f32 %v707, %v711
    %v714 = vtanh.pop %v712
    %v715 = vtanh.pop %v713
    %v716 = vsub.f32 %v58, %v714
    %v717 = vsub.f32 %v59, %v715
    %v718 = vmul.f32 %v701, %v716
    %v719 = vmul.f32 %v705, %v717
    %v720 = vadd.f32 %v714, %v718
    %v721 = vadd.f32 %v715, %v719
    %v722 = vpack.c.bf16 %v721, %v720
    %v723 = vld [vmem:[#allocation4] sm:$0xff]
    %v724 = vld [vmem:[#allocation4 + $0x8] sm:$0xff]
    %v725 = vld [vmem:[#allocation4 + $0x10] sm:$0xff]
    %v726 = vld [vmem:[#allocation4 + $0x18] sm:$0xff]
    %v727 = vld [vmem:[#allocation4 + $0x20] sm:$0xff]
    %v728 = vld [vmem:[#allocation4 + $0x28] sm:$0xff]
    %v729 = vld [vmem:[#allocation4 + $0x30] sm:$0xff]
    %v730 = vld [vmem:[#allocation4 + $0x38] sm:$0xff]
    %v731 = vld [vmem:[#allocation4 + $0x40] sm:$0xff]
    %v732 = vld [vmem:[#allocation4 + $0x48] sm:$0xff]
    %v733 = vld [vmem:[#allocation4 + $0x50] sm:$0xff]
    %v734 = vld [vmem:[#allocation4 + $0x58] sm:$0xff]
    %v735 = vld [vmem:[#allocation4 + $0x60] sm:$0xff]
    %v736 = vld [vmem:[#allocation4 + $0x68] sm:$0xff]
    %v737 = vld [vmem:[#allocation4 + $0x70] sm:$0xff]
    %v738 = vld [vmem:[#allocation4 + $0x78] sm:$0xff]
    %v739 = vld [vmem:[#allocation4 + $0x80] sm:$0xff]
    %v740 = vld [vmem:[#allocation4 + $0x88] sm:$0xff]
    %v741 = vld [vmem:[#allocation4 + $0x90] sm:$0xff]
    %v742 = vld [vmem:[#allocation4 + $0x98] sm:$0xff]
    %v743 = vld [vmem:[#allocation4 + $0xa0] sm:$0xff]
    %v744 = vld [vmem:[#allocation4 + $0xa8] sm:$0xff]
    %v745 = vld [vmem:[#allocation4 + $0xb0] sm:$0xff]
    %v746 = vld [vmem:[#allocation4 + $0xb8] sm:$0xff]
    %v747 = vld [vmem:[#allocation4 + $0xc0] sm:$0xff]
    %v748 = vld [vmem:[#allocation4 + $0xc8] sm:$0xff]
    %v749 = vld [vmem:[#allocation4 + $0xd0] sm:$0xff]
    %v750 = vld [vmem:[#allocation4 + $0xd8] sm:$0xff]
    %v751 = vld [vmem:[#allocation4 + $0xe0] sm:$0xff]
    %v752 = vld [vmem:[#allocation4 + $0xe8] sm:$0xff]
    %v753 = vld [vmem:[#allocation4 + $0xf0] sm:$0xff]
    %v754 = vld [vmem:[#allocation4 + $0xf8] sm:$0xff]
    %v787 = vunpack.c.l.b16 %v723
    %v788 = vunpack.c.h.b16 %v723
    %v789 = vunpack.c.l.b16 %v724
    %v790 = vunpack.c.h.b16 %v724
    %v791 = vunpack.c.l.b16 %v725
    %v792 = vunpack.c.h.b16 %v725
    %v793 = vunpack.c.l.b16 %v726
    %v794 = vunpack.c.h.b16 %v726
    %v795 = vunpack.c.l.b16 %v727
    %v796 = vunpack.c.h.b16 %v727
    %v797 = vunpack.c.l.b16 %v728
    %v798 = vunpack.c.h.b16 %v728
    %v799 = vunpack.c.l.b16 %v729
    %v800 = vunpack.c.h.b16 %v729
    %v801 = vunpack.c.l.b16 %v730
    %v802 = vunpack.c.h.b16 %v730
    %v803 = vunpack.c.l.b16 %v731
    %v804 = vunpack.c.h.b16 %v731
    %v805 = vunpack.c.l.b16 %v732
    %v806 = vunpack.c.h.b16 %v732
    %v807 = vunpack.c.l.b16 %v733
    %v808 = vunpack.c.h.b16 %v733
    %v809 = vunpack.c.l.b16 %v734
    %v810 = vunpack.c.h.b16 %v734
    %v811 = vunpack.c.l.b16 %v735
    %v812 = vunpack.c.h.b16 %v735
    %v813 = vunpack.c.l.b16 %v736
    %v814 = vunpack.c.h.b16 %v736
    %v815 = vunpack.c.l.b16 %v737
    %v816 = vunpack.c.h.b16 %v737
    %v817 = vunpack.c.l.b16 %v738
    %v818 = vunpack.c.h.b16 %v738
    %v819 = vunpack.c.l.b16 %v739
    %v820 = vunpack.c.h.b16 %v739
    %v821 = vunpack.c.l.b16 %v740
    %v822 = vunpack.c.h.b16 %v740
    %v823 = vunpack.c.l.b16 %v741
    %v824 = vunpack.c.h.b16 %v741
    %v825 = vunpack.c.l.b16 %v742
    %v826 = vunpack.c.h.b16 %v742
    %v827 = vunpack.c.l.b16 %v743
    %v828 = vunpack.c.h.b16 %v743
    %v829 = vunpack.c.l.b16 %v744
    %v830 = vunpack.c.h.b16 %v744
    %v831 = vunpack.c.l.b16 %v745
    %v832 = vunpack.c.h.b16 %v745
    %v833 = vunpack.c.l.b16 %v746
    %v834 = vunpack.c.h.b16 %v746
    %v835 = vunpack.c.l.b16 %v747
    %v836 = vunpack.c.h.b16 %v747
    %v837 = vunpack.c.l.b16 %v748
    %v838 = vunpack.c.h.b16 %v748
    %v839 = vunpack.c.l.b16 %v749
    %v840 = vunpack.c.h.b16 %v749
    %v841 = vunpack.c.l.b16 %v750
    %v842 = vunpack.c.h.b16 %v750
    %v843 = vunpack.c.l.b16 %v751
    %v844 = vunpack.c.h.b16 %v751
    %v845 = vunpack.c.l.b16 %v752
    %v846 = vunpack.c.h.b16 %v752
    %v847 = vunpack.c.l.b16 %v753
    %v848 = vunpack.c.h.b16 %v753
    %v849 = vunpack.c.l.b16 %v754
    %v850 = vunpack.c.h.b16 %v754
    %v851 = vpack.c.b16 %v791, %v787
    %v852 = vpack.c.b16 %v792, %v788
    %v853 = vpack.c.b16 %v793, %v789
    %v854 = vpack.c.b16 %v794, %v790
    %v855 = vpack.c.b16 %v799, %v795
    %v856 = vpack.c.b16 %v800, %v796
    %v857 = vpack.c.b16 %v801, %v797
    %v858 = vpack.c.b16 %v802, %v798
    %v859 = vpack.c.b16 %v807, %v803
    %v860 = vpack.c.b16 %v808, %v804
    %v861 = vpack.c.b16 %v809, %v805
    %v862 = vpack.c.b16 %v810, %v806
    %v863 = vpack.c.b16 %v815, %v811
    %v864 = vpack.c.b16 %v816, %v812
    %v865 = vpack.c.b16 %v817, %v813
    %v866 = vpack.c.b16 %v818, %v814
    %v867 = vpack.c.b16 %v823, %v819
    %v868 = vpack.c.b16 %v824, %v820
    %v869 = vpack.c.b16 %v825, %v821
    %v870 = vpack.c.b16 %v826, %v822
    %v871 = vpack.c.b16 %v831, %v827
    %v872 = vpack.c.b16 %v832, %v828
    %v873 = vpack.c.b16 %v833, %v829
    %v874 = vpack.c.b16 %v834, %v830
    %v875 = vpack.c.b16 %v839, %v835
    %v876 = vpack.c.b16 %v840, %v836
    %v877 = vpack.c.b16 %v841, %v837
    %v878 = vpack.c.b16 %v842, %v838
    %v879 = vpack.c.b16 %v847, %v843
    %v880 = vpack.c.b16 %v848, %v844
    %v881 = vpack.c.b16 %v849, %v845
    %v882 = vpack.c.b16 %v850, %v846
    %915 = vmatprep.subr.bf16.mxu0 %v852
    %916 = vmatpush1.bf16.msra.mxu0 %v851
    %917 = vmatprep.subr.bf16.mxu0 %v856
    %918 = vmatpush1.bf16.msra.mxu0 %v855
    %919 = vmatprep.subr.bf16.mxu0 %v860
    %920 = vmatpush1.bf16.msra.mxu0 %v859
    %921 = vmatprep.subr.bf16.mxu0 %v864
    %922 = vmatpush1.bf16.msra.mxu0 %v863
    %923 = vmatprep.subr.bf16.mxu0 %v868
    %924 = vmatpush1.bf16.msra.mxu0 %v867
    %925 = vmatprep.subr.bf16.mxu0 %v872
    %926 = vmatpush1.bf16.msra.mxu0 %v871
    %927 = vmatprep.subr.bf16.mxu0 %v876
    %928 = vmatpush1.bf16.msra.mxu0 %v875
    %929 = vmatprep.subr.bf16.mxu0 %v880
    %930 = vmatpush1.bf16.msra.mxu0 %v879
    %931 = vmatprep.subr.bf16.mxu0 0
    %932 = vmatpush1.bf16.msra.mxu0 0
    %933 = vmatprep.subr.bf16.mxu0 0
    %934 = vmatpush1.bf16.msra.mxu0 0
    %935 = vmatprep.subr.bf16.mxu0 0
    %936 = vmatpush1.bf16.msra.mxu0 0
    %937 = vmatprep.subr.bf16.mxu0 0
    %938 = vmatpush1.bf16.msra.mxu0 0
    %939 = vmatprep.subr.bf16.mxu0 0
    %940 = vmatpush1.bf16.msra.mxu0 0
    %941 = vmatprep.subr.bf16.mxu0 0
    %942 = vmatpush1.bf16.msra.mxu0 0
    %943 = vmatprep.subr.bf16.mxu0 0
    %944 = vmatpush1.bf16.msra.mxu0 0
    %945 = vmatprep.subr.bf16.mxu0 0
    %946 = vmatpush1.bf16.msra.mxu0 0
    %947 = vmatprep.mubr.bf16.mxu0 0
    %948 = vmatmul.mubr.bf16.gmra.mrb[0].mxu0 %v722
    %v949 = vpop.f32.mrb[0].mxu0
    %v950 = vadd.f32 0.0, %v949
    %v951 = vpop.f32.mrb[0].mxu0
    %v952 = vadd.f32 0.0, %v951
    %v953 = vpop.f32.mrb[0].mxu0
    %v954 = vadd.f32 0.0, %v953
    %v955 = vpop.f32.mrb[0].mxu0
    %v956 = vadd.f32 0.0, %v955
    %957 = vdwg.mxu0
    %958 = vmatprep.subr.bf16.mxu0 %v854
    %959 = vmatpush1.bf16.msra.mxu0 %v853
    %960 = vmatprep.subr.bf16.mxu0 %v858
    %961 = vmatpush1.bf16.msra.mxu0 %v857
    %962 = vmatprep.subr.bf16.mxu0 %v862
    %963 = vmatpush1.bf16.msra.mxu0 %v861
    %964 = vmatprep.subr.bf16.mxu0 %v866
    %965 = vmatpush1.bf16.msra.mxu0 %v865
    %966 = vmatprep.subr.bf16.mxu0 %v870
    %967 = vmatpush1.bf16.msra.mxu0 %v869
    %968 = vmatprep.subr.bf16.mxu0 %v874
    %969 = vmatpush1.bf16.msra.mxu0 %v873
    %970 = vmatprep.subr.bf16.mxu0 %v878
    %971 = vmatpush1.bf16.msra.mxu0 %v877
    %972 = vmatprep.subr.bf16.mxu0 %v882
    %973 = vmatpush1.bf16.msra.mxu0 %v881
    %974 = vmatprep.subr.bf16.mxu0 0
    %975 = vmatpush1.bf16.msra.mxu0 0
    %976 = vmatprep.subr.bf16.mxu0 0
    %977 = vmatpush1.bf16.msra.mxu0 0
    %978 = vmatprep.subr.bf16.mxu0 0
    %979 = vmatpush1.bf16.msra.mxu0 0
    %980 = vmatprep.subr.bf16.mxu0 0
    %981 = vmatpush1.bf16.msra.mxu0 0
    %982 = vmatprep.subr.bf16.mxu0 0
    %983 = vmatpush1.bf16.msra.mxu0 0
    %984 = vmatprep.subr.bf16.mxu0 0
    %985 = vmatpush1.bf16.msra.mxu0 0
    %986 = vmatprep.subr.bf16.mxu0 0
    %987 = vmatpush1.bf16.msra.mxu0 0
    %988 = vmatprep.subr.bf16.mxu0 0
    %989 = vmatpush1.bf16.msra.mxu0 0
    %990 = vmatprep.mubr.bf16.mxu0 0
    %991 = vmatmul.mubr.bf16.gmra.mrb[0].mxu0 %v722
    %v992 = vpop.f32.mrb[0].mxu0
    %v993 = vadd.f32 0.0, %v992
    %v994 = vpop.f32.mrb[0].mxu0
    %v995 = vadd.f32 0.0, %v994
    %v996 = vpop.f32.mrb[0].mxu0
    %v997 = vadd.f32 0.0, %v996
    %v998 = vpop.f32.mrb[0].mxu0
    %v999 = vadd.f32 0.0, %v998
    %1000 = vdwg.mxu0
    %v1001 = vadd.f32 %v950, %v186
    %v1002 = vadd.f32 %v952, %v190
    %v1003 = vadd.f32 %v954, %v186
    %v1004 = vadd.f32 %v956, %v190
    %v1005 = vxor.u32 %v1001, 2147483648
    %v1006 = vxor.u32 %v1002, 2147483648
    %v1007 = vxor.u32 %v1003, 2147483648
    %v1008 = vxor.u32 %v1004, 2147483648
    %v1009 = vmul.f32 %v1005, 1.442695
    %v1010 = vpow.pop %v1009
    %v1011 = vmul.f32 %v1006, 1.442695
    %v1012 = vpow.pop %v1011
    %v1013 = vmul.f32 %v1007, 1.442695
    %v1014 = vpow.pop %v1013
    %v1015 = vmul.f32 %v1008, 1.442695
    %v1016 = vpow.pop %v1015
    %v1017 = vadd.f32 %v1010, 1.0
    %v1018 = vadd.f32 %v1012, 1.0
    %v1019 = vadd.f32 %v1014, 1.0
    %v1020 = vadd.f32 %v1016, 1.0
    %v1021 = vrcp.pop %v1017
    %v1022 = vmul.f32 1.0, %v1021
    %v1023 = vrcp.pop %v1018
    %v1024 = vmul.f32 1.0, %v1023
    %v1025 = vrcp.pop %v1019
    %v1026 = vmul.f32 1.0, %v1025
    %v1027 = vrcp.pop %v1020
    %v1028 = vmul.f32 1.0, %v1027
    %v1029 = vadd.f32 %v993, %v198
    %v1030 = vadd.f32 %v997, %v198
    %v1031 = vadd.f32 %v995, %v205
    %v1032 = vadd.f32 %v999, %v205
    %v1033 = vmul.f32 %v1022, %v1031
    %v1034 = vmul.f32 %v1026, %v1032
    %v1035 = vadd.f32 %v1029, %v1033
    %v1036 = vadd.f32 %v1030, %v1034
    %v1037 = vtanh.pop %v1035
    %v1038 = vtanh.pop %v1036
    %v1039 = vsub.f32 %v720, %v1037
    %v1040 = vsub.f32 %v721, %v1038
    %v1041 = vmul.f32 %v1024, %v1039
    %v1042 = vmul.f32 %v1028, %v1040
    %v1043 = vadd.f32 %v1037, %v1041
    %v1044 = vadd.f32 %v1038, %v1042
    %1045 = vst [vmem:[%s8] sm:$0xff] %v1043
    %1046 = vst [vmem:[%s8 + $0x8] sm:$0xff] %v1044
    // Predicated region
    $region42: #{encoder_rnn_forward.1} parent=1 // pred_check
      _
    $region43: #{encoder_rnn_forward.1} parent=1 // pred_check_branch
      %1048 = sbr.rel (0) target = $region45
    $region44: #{encoder_rnn_forward.1} parent=1 // pred_region
      _
    $region45: #{encoder_rnn_forward.1} parent=1 // pred_fallthru
      _
    // Predicated region
    $region46: #{encoder_rnn_forward.1} parent=1 // pred_check
      _
    $region47: #{encoder_rnn_forward.1} parent=1 // pred_check_branch
      %1050 = sbr.rel (0) target = $region49
    $region48: #{encoder_rnn_forward.1} parent=1 // pred_region
      _
    $region49: #{encoder_rnn_forward.1} parent=1 // pred_fallthru
      _
    %1051 = vsyncpa [#allocation3], 1
    %1052 = vsyncpa [#allocation5], 1

</llo_original>
